<compile_context>
chip_gen: v6e
topology: v6e:2x2x1
jax: 0.10.0
libtpu: 0.0.40
codegen_flags: <defaults>
</compile_context>

<pallas_src>
from collections import OrderedDict

import jax
import jax.numpy as jnp
from jax import lax
from jax.experimental import pallas as pl
from jax.experimental.pallas import tpu as pltpu

MAX_TILE_D = 8192  # lane-aligned reduction tile over the flattened-parameter axis (sweepable)


# ----------------------------- Pallas kernel ---------------------------------
def _make_rbf_gram_kernel(needs_mask: bool):
    """Builds the kernel; `needs_mask` is a static flag for a partial last D-tile."""

    def kernel(scale_ref, dvalid_ref, x_ref, o_ref):
        k = pl.program_id(0)
        m, tile_d = x_ref.shape

        @pl.when(k == 0)
        def _init():
            o_ref[...] = jnp.zeros_like(o_ref)

        x = x_ref[...].astype(jnp.float32)  # (m, tile_d)

        if needs_mask:
            # Zero out lanes beyond the true D (last tile may overrun the array bounds,
            # whose contents are unspecified). VPU work, hidden under the DMA.
            col = lax.broadcasted_iota(jnp.int32, (m, tile_d), 1) + k * tile_d
            x = jnp.where(col < dvalid_ref[0], x, 0.0)

        # X_tile @ X_tile^T via contraction on the last axes (no materialized transpose).
        o_ref[...] += lax.dot_general(
            x, x,
            dimension_numbers=(((1,), (1,)), ((), ())),
            preferred_element_type=jnp.float32,
        )

        @pl.when(k == pl.num_programs(0) - 1)
        def _finalize():
            g = o_ref[...]                                       # (m, m) = X X^T
            rid = lax.broadcasted_iota(jnp.int32, (m, m), 0)
            cid = lax.broadcasted_iota(jnp.int32, (m, m), 1)
            # Row squared norms are exactly diag(X X^T).
            sq = jnp.sum(jnp.where(rid == cid, g, 0.0), axis=-1, keepdims=True)  # (m, 1)
            d2 = jnp.maximum(sq + sq.T - 2.0 * g, 0.0)           # pairwise squared distances
            o_ref[...] = jnp.exp(d2 * scale_ref[0]).astype(o_ref.dtype)

    return kernel


def rbf_gram_pallas(x_flat: jax.Array, epsilon: float) -> jax.Array:
    """x_flat: (model_bs, D) float array -> (model_bs, model_bs) RBF Gram matrix."""
    if float(epsilon) <= 0.0:
        raise ValueError("epsilon must be positive for the RBF kernel")

    x_flat = x_flat.astype(jnp.float32)
    m, d = x_flat.shape

    d128 = ((d + 127) // 128) * 128
    tile_d = min(MAX_TILE_D, d128)           # big lane-aligned tile; no HBM pad pass needed
    grid = (pl.cdiv(d, tile_d),)
    needs_mask = (d % tile_d) != 0

    scale = jnp.asarray([-1.0 / (2.0 * float(epsilon))], dtype=jnp.float32)
    d_valid = jnp.asarray([d], dtype=jnp.int32)

    cost = pl.CostEstimate(
        flops=2 * m * m * d,
        transcendentals=m * m,
        bytes_accessed=4 * m * d + 4 * m * m,
    )

    return pl.pallas_call(
        _make_rbf_gram_kernel(needs_mask),
        out_shape=jax.ShapeDtypeStruct((m, m), jnp.float32),
        grid_spec=pltpu.PrefetchScalarGridSpec(
            num_scalar_prefetch=0,
            grid=grid,
            in_specs=[
                pl.BlockSpec(memory_space=pltpu.MemorySpace.SMEM),   # scale = -1/(2*eps)
                pl.BlockSpec(memory_space=pltpu.MemorySpace.SMEM),   # true D (for masking)
                pl.BlockSpec((m, tile_d), lambda k: (0, k)),         # X tile over D
            ],
            out_specs=pl.BlockSpec((m, m), lambda k: (0, 0)),        # resident accumulator/output
        ),
        compiler_params=pltpu.CompilerParams(dimension_semantics=("arbitrary",)),
        cost_estimate=cost,
    )(scale, d_valid, x_flat)


# ------------------------------ glue (plain JAX) ------------------------------
def flatten_keys(d, prefix=""):
    out = OrderedDict()
    for k, v in d.items():
        key = f"{prefix}.{k}" if prefix else k
        if isinstance(v, (dict, OrderedDict)):
            out.update(flatten_keys(v, key))
        else:
            out[key] = v
    return out


class WeightKernelPallas:
    """JAX/Pallas equivalent of WeightKernel(kernel='rbf')."""

    def __init__(self, kernel: str = "rbf", detach_diag: bool = False,
                 readd_diag: bool = True, params: dict = None):
        assert kernel == "rbf", "only the rbf kernel is implemented in this script"
        self.kernel = kernel
        self.detach_diag = detach_diag      # autograd-only effect; no-op on forward values
        self.readd = readd_diag
        dparams = {"epsilon": 1.0}          # default KERN_PARAMS for rbf
        if params is not None:
            dparams.update(params)
        self.params = {k: float(v) for k, v in dparams.items()}

    @staticmethod
    def filter_params(param_dict):
        flat = flatten_keys(param_dict)
        return OrderedDict((k, v) for k, v in flat.items() if ".norm_buffer." not in k)

    @staticmethod
    def flatten_weights(params):
        flat_params = WeightKernelPallas.filter_params(params)
        par_params = list(flat_params.values())
        if len(par_params) == 0:
            raise ValueError("No parameters found in the model")
        model_bs = par_params[0].shape[0]
        flats = [p.reshape(model_bs, -1) for p in par_params]
        pset = jnp.concatenate(flats, axis=1)
        return {"params": flat_params, "flat_params": pset,
                "model_bs": model_bs, "__flat__": True}

    def forward(self, params, feats=None, preds=None, track=None, layer=None):
        if isinstance(params, (dict, OrderedDict)) and "__flat__" not in params:
            params = self.flatten_weights(params)
        x = params["flat_params"]           # (model_bs, D)
        # batched_kernel(..., flat_second=False): reshape(mbs,-1), unsqueeze(0), gram, squeeze(0)
        return rbf_gram_pallas(x, self.params["epsilon"])


# ----------------------------------- main -------------------------------------
if __name__ == "__main__":
    key = jax.random.PRNGKey(0)
    model_bs = 4  # ensemble size

    # Synthetic ensemble parameter dict (per-parameter leading model_bs axis),
    # including a '.norm_buffer.' entry that must be filtered out. Members are
    # small perturbations of a shared base so off-diagonal Gram values are meaningful.
    k1, k2, k3, k4, k5, k6, k7, k8, k9 = jax.random.split(key, 9)

    def member(base_key, noise_key, shape):
        base = jax.random.normal(base_key, shape, dtype=jnp.float32)
        noise = jax.random.normal(noise_key, (model_bs,) + shape, dtype=jnp.float32)
        return base[None] + 0.1 * noise

    params = OrderedDict(
        layer1=OrderedDict(
            weight=member(k1, k2, (8, 16)),
            bias=member(k3, k4, (8,)),
        ),
        layer2=OrderedDict(
            weight=member(k5, k6, (10, 8)),
            bias=member(k7, k8, (10,)),
            norm_buffer=OrderedDict(  # must be dropped by filter_params
                running_mean=jax.random.normal(k9, (model_bs, 10), dtype=jnp.float32),
            ),
        ),
    )

    kernel_mod = WeightKernelPallas(kernel="rbf", params={"epsilon": 2.0})
    gram = kernel_mod.forward(params, feats=None, preds=None, track=None)
    gram = jax.block_until_ready(gram)

    # Pure-JAX reference check
    flat = kernel_mod.flatten_weights(params)["flat_params"].astype(jnp.float32)
    n = jnp.sum(flat * flat, axis=-1, keepdims=True)
    d2 = jnp.maximum(n + n.T - 2.0 * flat @ flat.T, 0.0)
    ref = jnp.exp(-d2 / (2.0 * 2.0))
    assert gram.shape == (model_bs, model_bs)
    assert jnp.allclose(gram, ref, atol=1e-5, rtol=1e-5), (gram, ref)

    print("KERNEL_OK")
</pallas_src>

<mosaic_0001>
module attributes {stable_mosaic.version = 11 : i64} {
  func.func @kernel(%arg0: i32, %arg1: memref<1xf32, #tpu.memory_space<smem>>, %arg2: memref<1xi32, #tpu.memory_space<smem>>, %arg3: memref<4x256xf32, #tpu.memory_space<vmem>>, %arg4: memref<4x4xf32, #tpu.memory_space<vmem>>) attributes {dimension_semantics = [#tpu.dimension_semantics<arbitrary>], iteration_bounds = array<i64: 1>, scalar_prefetch = 0 : i64, scratch_operands = 0 : i64, tpu.core_type = #tpu.core_type<tc>, window_params = [{transform_indices = @transform_0, window_bounds = array<i64: 1>}, {transform_indices = @transform_1, window_bounds = array<i64: 1>}, {transform_indices = @transform_2, window_bounds = array<i64: 4, 256>}, {pipeline_mode = #tpu.pipeline_mode<synchronous>, transform_indices = @transform_3, window_bounds = array<i64: 4, 4>}]} {
    %c0_i32 = arith.constant 0 : i32
    %0 = arith.cmpi eq, %arg0, %c0_i32 : i32
    %1 = arith.extui %0 : i1 to i32
    %c0_i32_0 = arith.constant 0 : i32
    %2 = arith.cmpi ne, %1, %c0_i32_0 : i32
    scf.if %2 {
      %cst_10 = arith.constant 0.000000e+00 : f32
      %20 = vector.broadcast %cst_10 : f32 to vector<4x4xf32>
      %c0_11 = arith.constant 0 : index
      %c0_12 = arith.constant 0 : index
      %21 = vector.load %arg4[%c0_11, %c0_12] : memref<4x4xf32, #tpu.memory_space<vmem>>, vector<4x4xf32>
      tpu.vector_store %arg4[%c0_11, %c0_12], %20 {strides = array<i32>} : memref<4x4xf32, #tpu.memory_space<vmem>>, vector<4x4xf32>,
    } else {
    }
    %c0 = arith.constant 0 : index
    %c0_1 = arith.constant 0 : index
    %3 = vector.load %arg3[%c0, %c0_1] : memref<4x256xf32, #tpu.memory_space<vmem>>, vector<4x256xf32>
    %4 = tpu.iota {dimensions = array<i32: 1>} : vector<4x256xi32>
    %c256_i32 = arith.constant 256 : i32
    %5 = arith.muli %arg0, %c256_i32 : i32
    %6 = vector.broadcast %5 : i32 to vector<4x256xi32>
    %7 = arith.addi %4, %6 : vector<4x256xi32>
    %c0_2 = arith.constant 0 : index
    %8 = memref.load %arg2[%c0_2] : memref<1xi32, #tpu.memory_space<smem>>
    %9 = vector.broadcast %8 : i32 to vector<4x256xi32>
    %10 = arith.cmpi slt, %7, %9 : vector<4x256xi32>
    %cst = arith.constant 0.000000e+00 : f32
    %11 = vector.broadcast %cst : f32 to vector<4x256xf32>
    %12 = arith.select %10, %3, %11 : vector<4x256xi1>, vector<4x256xf32>
    %c0_3 = arith.constant 0 : index
    %c0_4 = arith.constant 0 : index
    %13 = vector.load %arg4[%c0_3, %c0_4] : memref<4x4xf32, #tpu.memory_space<vmem>>, vector<4x4xf32>
    %cst_5 = arith.constant dense<0.000000e+00> : vector<4x4xf32>
    %14 = tpu.matmul %12, %12, %cst_5 {dimension_numbers = #tpu.dot_dimension_numbers<[1], [1], [0], [0], [0, 0, 1, 0], [], []>} : vector<4x256xf32>, vector<4x256xf32>, vector<4x4xf32> -> vector<4x4xf32>
    %15 = arith.addf %13, %14 : vector<4x4xf32>
    %c0_6 = arith.constant 0 : index
    %c0_7 = arith.constant 0 : index
    %16 = vector.load %arg4[%c0_6, %c0_7] : memref<4x4xf32, #tpu.memory_space<vmem>>, vector<4x4xf32>
    tpu.vector_store %arg4[%c0_6, %c0_7], %15 {strides = array<i32>} : memref<4x4xf32, #tpu.memory_space<vmem>>, vector<4x4xf32>,
    %c0_i32_8 = arith.constant 0 : i32
    %17 = arith.cmpi eq, %arg0, %c0_i32_8 : i32
    %18 = arith.extui %17 : i1 to i32
    %c0_i32_9 = arith.constant 0 : i32
    %19 = arith.cmpi ne, %18, %c0_i32_9 : i32
    scf.if %19 {
      %c0_10 = arith.constant 0 : index
      %c0_11 = arith.constant 0 : index
      %20 = vector.load %arg4[%c0_10, %c0_11] : memref<4x4xf32, #tpu.memory_space<vmem>>, vector<4x4xf32>
      %21 = tpu.iota {dimensions = array<i32: 0>} : vector<4x4xi32>
      %22 = tpu.iota {dimensions = array<i32: 1>} : vector<4x4xi32>
      %23 = arith.cmpi eq, %21, %22 : vector<4x4xi32>
      %cst_12 = arith.constant 0.000000e+00 : f32
      %24 = vector.broadcast %cst_12 : f32 to vector<4x4xf32>
      %25 = arith.select %23, %20, %24 : vector<4x4xi1>, vector<4x4xf32>
      %cst_13 = arith.constant dense<0.000000e+00> : vector<4xf32>
      %26 = vector.multi_reduction <add>, %25, %cst_13 [1] : vector<4x4xf32> to vector<4xf32>
      %27 = vector.shape_cast %26 : vector<4xf32> to vector<4x1xf32>
      %28 = tpu.transpose %27, [1, 0] : vector<4x1xf32> -> vector<1x4xf32>
      %29 = vector.broadcast %27 : vector<4x1xf32> to vector<4x4xf32>
      %30 = vector.broadcast %28 : vector<1x4xf32> to vector<4x4xf32>
      %31 = arith.addf %29, %30 : vector<4x4xf32>
      %cst_14 = arith.constant 2.000000e+00 : f32
      %32 = vector.broadcast %cst_14 : f32 to vector<4x4xf32>
      %33 = arith.mulf %32, %20 : vector<4x4xf32>
      %34 = arith.subf %31, %33 : vector<4x4xf32>
      %cst_15 = arith.constant 0.000000e+00 : f32
      %35 = vector.broadcast %cst_15 : f32 to vector<4x4xf32>
      %36 = arith.maximumf %34, %35 : vector<4x4xf32>
      %c0_16 = arith.constant 0 : index
      %37 = memref.load %arg1[%c0_16] : memref<1xf32, #tpu.memory_space<smem>>
      %38 = vector.broadcast %37 : f32 to vector<4x4xf32>
      %39 = arith.mulf %36, %38 : vector<4x4xf32>
      %40 = math.exp %39 : vector<4x4xf32>
      %c0_17 = arith.constant 0 : index
      %c0_18 = arith.constant 0 : index
      %41 = vector.load %arg4[%c0_17, %c0_18] : memref<4x4xf32, #tpu.memory_space<vmem>>, vector<4x4xf32>
      tpu.vector_store %arg4[%c0_17, %c0_18], %40 {strides = array<i32>} : memref<4x4xf32, #tpu.memory_space<vmem>>, vector<4x4xf32>,
    } else {
    }
    return
  }
  func.func @transform_0(%arg0: i32) -> i32 {
    %c0_i32 = arith.constant 0 : i32
    %c0_i32_0 = arith.constant 0 : i32
    return %c0_i32 : i32
  }
  func.func @transform_1(%arg0: i32) -> i32 {
    %c0_i32 = arith.constant 0 : i32
    %c0_i32_0 = arith.constant 0 : i32
    return %c0_i32 : i32
  }
  func.func @transform_2(%arg0: i32) -> (i32, i32) {
    %c0_i32 = arith.constant 0 : i32
    %c0_i32_0 = arith.constant 0 : i32
    return %c0_i32, %arg0 : i32, i32
  }
  func.func @transform_3(%arg0: i32) -> (i32, i32) {
    %c0_i32 = arith.constant 0 : i32
    %c0_i32_0 = arith.constant 0 : i32
    %c0_i32_1 = arith.constant 0 : i32
    return %c0_i32, %c0_i32_0 : i32, i32
  }
}

</mosaic_0001>

<llo_original>
// kernel: tpu_custom_call.1
$region0: #{tpu_custom_call.1}
  #allocation0 [shape = 'u32[]', space=smem, size = 0x4, offset = 0x4, fixed_abs, tag = 'smem constant byte address 0x4 - core index']
  #allocation1 [shape = 'u32[144,128]{1,0:T(1,128)}', space=vmem, size = 0x12000, scoped, tag = 'internal scratch']
  #allocation2 [shape = 'f32[1]{0:T(128)S(6)}', space=smem, size = 0x200, scoped, tag = 'scoped memory for tpu_custom_call.1']
  #allocation3 [shape = 's32[1]{0:T(128)S(6)}', space=smem, size = 0x200, scoped, tag = 'scoped memory for tpu_custom_call.1']
  %s0 = inlined_call_operand.<no memory space> [shape: f32[1], index: 0, kind: input, shape index: {}]
  %s1 = inlined_call_operand.<no memory space> [shape: s32[1], index: 1, kind: input, shape index: {}]
  %s2 = inlined_call_operand.hbm [shape: f32[4,226], index: 2, kind: input, shape index: {}]
  %s3 = inlined_call_operand.hbm [shape: f32[4,4], index: 3, kind: output, shape index: {}]
  %s4 = sld [smem:[#allocation0]]
  $region34: #{tpu_custom_call.1} parent=0
    _
  %s6 = ssub.s32 1, %s4
  %s7 = scalar_select 0, %s6, %s4
  %8 = sst [smem:[#allocation2]] %s0
  %9 = sst [smem:[#allocation3]] %s1
  $region1: #{tpu_custom_call.1} parent=0
    #allocation4 [shape = 'u8[4096]{0}', space=vmem, size = 0x1000, scoped, tag = 'input window, operand 2, single buffered']
    #allocation5 [shape = 's32[1]{0}', space=sflag, size = 0x4, scoped, tag = 'scoped memory for tpu_custom_call.1']
    #allocation6 [shape = 's32[1]{0}', space=sflag, size = 0x4, scoped, tag = 'scoped memory for tpu_custom_call.1']
    #allocation7 [shape = 'u8[2048]{0}', space=vmem, size = 0x800, scoped, tag = 'output window, operand 0, single buffered']
    %10 = vsyncpa [#allocation5], 0
    %11 = vsyncpa [#allocation6], 0
    // Predicated region
    $region2: #{tpu_custom_call.1} parent=1 // pred_check
      _
    $region3: #{tpu_custom_call.1} parent=1 // pred_check_branch
      %13 = sbr.rel (0) target = $region5
    $region4: #{tpu_custom_call.1} parent=1 // pred_region
      _
    $region5: #{tpu_custom_call.1} parent=1 // pred_fallthru
      _
    // Predicated region
    $region6: #{tpu_custom_call.1} parent=1 // pred_check
      _
    $region7: #{tpu_custom_call.1} parent=1 // pred_check_branch
      %15 = sbr.rel (0) target = $region9
    $region8: #{tpu_custom_call.1} parent=1 // pred_region
      _
    $region9: #{tpu_custom_call.1} parent=1 // pred_fallthru
      _
    // Predicated region
    $region10: #{tpu_custom_call.1} parent=1 // pred_check
      _
    $region11: #{tpu_custom_call.1} parent=1 // pred_check_branch
      %17 = sbr.rel (0) target = $region13
    $region12: #{tpu_custom_call.1} parent=1 // pred_region
      %s19 = ssub.s32 128, 128
      %20 = vsyncadd [#allocation5], %s19
      %s22 = sshll.u32 [#allocation4], 4
      %s23 = int_to_ptr.vmem [resolvable:$true] %s22
      %25 = dma.hbm_to_vmem [thread:$0]  %s2, 128, %s23, [#allocation5]
    $region13: #{tpu_custom_call.1} parent=1 // pred_fallthru
      _
    // Predicated region
    $region14: #{tpu_custom_call.1} parent=1 // pred_check
      _
    $region15: #{tpu_custom_call.1} parent=1 // pred_check_branch
      %27 = sbr.rel (0) target = $region17
    $region16: #{tpu_custom_call.1} parent=1 // pred_region
      %28 = dma.done [#allocation5], 128
    $region17: #{tpu_custom_call.1} parent=1 // pred_fallthru
      _
    %p29 = scmp.eq.s32.totalorder 0, 0
    // Predicated region
    $region18: #{tpu_custom_call.1} parent=1 // pred_check
      %p30 = pneg %p29
    $region19: #{tpu_custom_call.1} parent=1 // pred_check_branch
      %32 = sbr.rel (%p30) target = $region21
    $region20: #{tpu_custom_call.1} parent=1 // pred_region
      %vm33 = vcmask 27648
      %34 = vst.msk [vmem:[#allocation7] sm:$0xf] %vm33, 0.0
    $region21: #{tpu_custom_call.1} parent=1 // pred_fallthru
      _
    %v35 = vld [vmem:[#allocation4] sm:$0xff]
    %v36 = vlaneseq
    %v37 = vand.u32 %v36, 127
    %v38 = vadd.s32 %v37, 128
    %s39 = smul.u32 0, 256
    %v40 = vstv %s39
    %v41 = vadd.s32 %v37, %v40
    %v42 = vadd.s32 %v38, %v40
    %s43 = sld [smem:[#allocation3]]
    %v44 = vstv %s43
    %vm45 = vcmp.lt.s32.totalorder %v41, %v44
    %vm46 = vcmp.lt.s32.totalorder %v42, %v44
    %v48 = vcombine.high %v35, %v35
    %v50 = vsel %vm45, %v35, 0.0
    %v51 = vsel %vm46, %v48, 0.0
    %v52 = vld [vmem:[#allocation7] sm:$0xf]
    %53 = vmatprep.subr.mxu0 0.0
    %54 = vmatpush1.xpose.msra.mxu0 0.0
    %55 = vmatprep.subr.mxu0 0.0
    %56 = vmatpush1.xpose.msra.mxu0 0.0
    %57 = vmatprep.subr.mxu0 0.0
    %58 = vmatpush1.xpose.msra.mxu0 0.0
    %59 = vmatprep.subr.mxu0 0.0
    %60 = vmatpush1.xpose.msra.mxu0 0.0
    %61 = vmatprep.subr.mxu0 0.0
    %62 = vmatpush1.xpose.msra.mxu0 0.0
    %63 = vmatprep.subr.mxu0 0.0
    %64 = vmatpush1.xpose.msra.mxu0 0.0
    %65 = vmatprep.subr.mxu0 0.0
    %66 = vmatpush1.xpose.msra.mxu0 0.0
    %67 = vmatprep.subr.mxu0 0.0
    %68 = vmatpush1.xpose.msra.mxu0 0.0
    %69 = vmatprep.subr.mxu0 0.0
    %70 = vmatpush1.xpose.msra.mxu0 0.0
    %71 = vmatprep.subr.mxu0 0.0
    %72 = vmatpush1.xpose.msra.mxu0 0.0
    %73 = vmatprep.subr.mxu0 0.0
    %74 = vmatpush1.xpose.msra.mxu0 0.0
    %75 = vmatprep.subr.mxu0 0.0
    %76 = vmatpush1.xpose.msra.mxu0 0.0
    %77 = vmatprep.subr.mxu0 0.0
    %78 = vmatpush1.xpose.msra.mxu0 0.0
    %79 = vmatprep.subr.mxu0 0.0
    %80 = vmatpush1.xpose.msra.mxu0 0.0
    %81 = vmatprep.subr.mxu0 0.0
    %82 = vmatpush1.xpose.msra.mxu0 0.0
    %83 = vmatprep.subr.mxu0 %v51
    %84 = vmatpush1.xpose.msra.mxu0 %v50
    %85 = vmatprep.subr.mxu0 0.0
    %86 = vmatpush2.xpose.msra.mxu0 0.0
    %87 = vmatprep.subr.mxu0 0.0
    %88 = vmatpush2.xpose.msra.mxu0 0.0
    %89 = vmatprep.subr.mxu0 0.0
    %90 = vmatpush2.xpose.msra.mxu0 0.0
    %91 = vmatprep.subr.mxu0 0.0
    %92 = vmatpush2.xpose.msra.mxu0 0.0
    %93 = vmatprep.subr.mxu0 0.0
    %94 = vmatpush2.xpose.msra.mxu0 0.0
    %95 = vmatprep.subr.mxu0 0.0
    %96 = vmatpush2.xpose.msra.mxu0 0.0
    %97 = vmatprep.subr.mxu0 0.0
    %98 = vmatpush2.xpose.msra.mxu0 0.0
    %99 = vmatprep.subr.mxu0 0.0
    %100 = vmatpush2.xpose.msra.mxu0 0.0
    %101 = vmatprep.subr.mxu0 0.0
    %102 = vmatpush2.xpose.msra.mxu0 0.0
    %103 = vmatprep.subr.mxu0 0.0
    %104 = vmatpush2.xpose.msra.mxu0 0.0
    %105 = vmatprep.subr.mxu0 0.0
    %106 = vmatpush2.xpose.msra.mxu0 0.0
    %107 = vmatprep.subr.mxu0 0.0
    %108 = vmatpush2.xpose.msra.mxu0 0.0
    %109 = vmatprep.subr.mxu0 0.0
    %110 = vmatpush2.xpose.msra.mxu0 0.0
    %111 = vmatprep.subr.mxu0 0.0
    %112 = vmatpush2.xpose.msra.mxu0 0.0
    %113 = vmatprep.subr.mxu0 0.0
    %114 = vmatpush2.xpose.msra.mxu0 0.0
    %115 = vmatprep.subr.mxu0 0.0
    %116 = vmatpush2.xpose.msra.mxu0 0.0
    %117 = vmatprep.mubr.f32.mxu0 %v51
    %118 = vmatmul.mubr.f32.gmra.mxu0 %v50
    %v119 = vpop.f32.mrf.mxu0
    %v120 = vadd.f32 0.0, %v119
    %v121 = vpop.f32.mrf.mxu0
    %122 = vdwg.mxu0
    %v123 = vadd.f32 %v52, %v120
    %vm124 = vcmask 27648
    %125 = vst.msk [vmem:[#allocation7] sm:$0xf] %vm124, %v123
    // Predicated region
    $region22: #{tpu_custom_call.1} parent=1 // pred_check
      %p126 = pneg %p29
    $region23: #{tpu_custom_call.1} parent=1 // pred_check_branch
      %128 = sbr.rel (%p126) target = $region25
    $region24: #{tpu_custom_call.1} parent=1 // pred_region
      %v129 = vld [vmem:[#allocation7] sm:$0xf]
      %v130 = vlaneseq
      %v131 = vshrl.u32 %v130, 7
      %vm132 = vcmp.eq.s32.totalorder %v131, %v37
      %v133 = vsel %vm132, %v129, 0.0
      %v134 = vsel %vm124, %v133, 0.0
      %135 = vadd.xlane.f32.xlu0 %v134
      %v136 = vpop.xlane.xlu0 %135
      %137 = vxpose.xlu0.b32.start [1/16] %v136, 128
      %138 = vxpose.xlu0.b32.cont [2/16] 0.0, 128
      %139 = vxpose.xlu0.b32.cont [3/16] 0.0, 128
      %140 = vxpose.xlu0.b32.cont [4/16] 0.0, 128
      %141 = vxpose.xlu0.b32.cont [5/16] 0.0, 128
      %142 = vxpose.xlu0.b32.cont [6/16] 0.0, 128
      %143 = vxpose.xlu0.b32.cont [7/16] 0.0, 128
      %144 = vxpose.xlu0.b32.cont [8/16] 0.0, 128
      %145 = vxpose.xlu0.b32.cont [9/16] 0.0, 128
      %146 = vxpose.xlu0.b32.cont [10/16] 0.0, 128
      %147 = vxpose.xlu0.b32.cont [11/16] 0.0, 128
      %148 = vxpose.xlu0.b32.cont [12/16] 0.0, 128
      %149 = vxpose.xlu0.b32.cont [13/16] 0.0, 128
      %150 = vxpose.xlu0.b32.cont [14/16] 0.0, 128
      %151 = vxpose.xlu0.b32.cont [15/16] 0.0, 128
      %152 = vxpose.xlu0.b32.end [16/16] 0.0, 128
      %v153 = vpop.trf.xlu0
      %v154 = vpop.trf.xlu0
      %v155 = vpop.trf.xlu0
      %v156 = vpop.trf.xlu0
      %v157 = vpop.trf.xlu0
      %v158 = vpop.trf.xlu0
      %v159 = vpop.trf.xlu0
      %v160 = vpop.trf.xlu0
      %v161 = vpop.trf.xlu0
      %v162 = vpop.trf.xlu0
      %v163 = vpop.trf.xlu0
      %v164 = vpop.trf.xlu0
      %v165 = vpop.trf.xlu0
      %v166 = vpop.trf.xlu0
      %v167 = vpop.trf.xlu0
      %v168 = vpop.trf.xlu0
      %v169 = vlaneseq
      %v170 = vshrl.u32 %v169, 7
      %v171 = vsub.s32 0, %v170
      %v172 = vrot.slane %v153, %v171
      %v173 = vadd.f32 %v136, %v172
      %v174 = vmul.f32 %v129, 2.0
      %v175 = vsub.f32 %v173, %v174
      %v176 = vmax.f32 %v175, 0.0
      %s177 = sld [smem:[#allocation2]]
      %v178 = vstv %s177
      %v179 = vmul.f32 %v176, %v178
      %v180 = vmul.f32 %v179, 1.442695
      %v181 = vpow.pop %v180
      %182 = vst.msk [vmem:[#allocation7] sm:$0xf] %vm124, %v181
    $region25: #{tpu_custom_call.1} parent=1 // pred_fallthru
      _
    // Predicated region
    $region26: #{tpu_custom_call.1} parent=1 // pred_check
      _
    $region27: #{tpu_custom_call.1} parent=1 // pred_check_branch
      %184 = sbr.rel (0) target = $region29
    $region28: #{tpu_custom_call.1} parent=1 // pred_region
      %s186 = ssub.s32 64, 64
      %187 = vsyncadd [#allocation6], %s186
      %s189 = sshll.u32 [#allocation7], 4
      %s190 = int_to_ptr.vmem [resolvable:$true] %s189
      %192 = dma.vmem_to_hbm [thread:$0]  %s190, 64, %s3, [#allocation6]
    $region29: #{tpu_custom_call.1} parent=1 // pred_fallthru
      _
    // Predicated region
    $region30: #{tpu_custom_call.1} parent=1 // pred_check
      _
    $region31: #{tpu_custom_call.1} parent=1 // pred_check_branch
      %194 = sbr.rel (0) target = $region33
    $region32: #{tpu_custom_call.1} parent=1 // pred_region
      %195 = dma.done [#allocation6], 64
    $region33: #{tpu_custom_call.1} parent=1 // pred_fallthru
      _
    %196 = vsyncpa [#allocation5], 1
    %197 = vsyncpa [#allocation6], 1

</llo_original>
